<compile_context>
chip_gen: v5e
topology: v5e:2x2
jax: 0.10.0
libtpu: 0.0.40
codegen_flags: <defaults>
</compile_context>

<pallas_src>
import functools

import jax
import jax.numpy as jnp
from jax.experimental import pallas as pl
from jax.experimental.pallas import tpu as pltpu


def _round_up(x, m):
    return (x + m - 1) // m * m


def _embed_sum_dropout_kernel(
    seed_ref, ids_ref, w_ref, o_ref, acc_ref,
    *, L, tm, tvk, vchunk, d_pad, p, apply_dropout,
):
    # All grid-position queries hoisted to the top of the body (never inside pl.when).
    i = pl.program_id(0)
    k = pl.program_id(1)
    nk = pl.num_programs(1)

    @pl.when(k == 0)
    def _init():
        acc_ref[...] = jnp.zeros_like(acc_ref)

    ids = ids_ref[...]                         # (tm, L) int32
    lo = k * tvk
    # Scalar "does this row tile reference this vocab slice at all?" gate.
    hit = jnp.any((ids >= lo) & (ids < lo + tvk))

    @pl.when(hit)
    def _compute():
        ids_rel = ids - lo                     # small (tm, L) tile op, done once
        acc = acc_ref[...]
        for off in range(0, tvk, vchunk):      # static Python loop over lane chunks
            cs = min(vchunk, tvk - off)
            col = jax.lax.broadcasted_iota(jnp.int32, (tm, cs), 1)
            ids_c = ids_rel - off              # small tile op per chunk
            counts = (ids_c[:, 0:1] == col).astype(jnp.int32)
            for l in range(1, L):              # L is small and static
                counts = counts + (ids_c[:, l:l + 1] == col).astype(jnp.int32)
            # counts <= L, exact in bf16; MXU bf16 x bf16 -> f32 accumulate.
            acc = acc + jnp.dot(
                counts.astype(jnp.bfloat16),
                w_ref[off:off + cs, :],
                preferred_element_type=jnp.float32,
            )
        acc_ref[...] = acc

    @pl.when(k == nk - 1)
    def _finalize():
        acc = acc_ref[...]
        if apply_dropout:
            # Counter-based hash PRNG keyed on (seed, global element index); the mask
            # is independent of the tiling choice.  All key math in uint32.
            row = (jax.lax.broadcasted_iota(jnp.int32, (tm, d_pad), 0) + i * tm)
            cix = jax.lax.broadcasted_iota(jnp.int32, (tm, d_pad), 1)
            key = (row.astype(jnp.uint32) * jnp.uint32(d_pad)
                   + cix.astype(jnp.uint32)
                   + seed_ref[0].astype(jnp.uint32))
            # murmur3-style integer finalizer
            key = key ^ (key >> 16)
            key = key * jnp.uint32(0x7FEB352D)
            key = key ^ (key >> 15)
            key = key * jnp.uint32(0x846CA68B)
            key = key ^ (key >> 16)
            thr = jnp.uint32(min(int(p * (1 << 32)), (1 << 32) - 1))
            keep = key >= thr                  # drop with probability p
            acc = jnp.where(keep, acc * (1.0 / (1.0 - p)), 0.0)
        o_ref[...] = acc.astype(o_ref.dtype)


def multi_label_embedding(
    ids, weight, *, dropout=0.5, training=True, seed=0, tm=512, tvk=512, vchunk=256
):
    """Forward pass of MultiLabelEmbeddingLayer.

    ids:    (B, S, L) int32 label lists, padded with padding_idx=0
    weight: (V, D) float32 embedding table, row 0 should be zero (padding_idx=0)
    returns (B, S, D) float32
    """
    B, S, L = ids.shape
    V, D = weight.shape
    N = B * S

    d_pad = _round_up(D, 128)                  # lane-dense output stores

    # Row tiling: big tiles, but guarantee >= 2 row tiles when possible so the
    # "parallel" axis can shard across v7x's 2 TensorCores.
    tm_cap = _round_up(max(8, (N + 1) // 2), 8)
    tm_eff = max(8, min(int(tm), tm_cap))
    n_pad = _round_up(N, tm_eff)

    # Vocab tiling: keep the whole (bf16) table resident when it is small, otherwise
    # tile the vocab axis and reduce into the accumulator.
    v128 = _round_up(V, 128)
    if v128 * d_pad * 2 <= (8 << 20):          # <= 8 MiB bf16 table -> resident
        tvk_eff = v128
    else:
        tvk_eff = min(_round_up(int(tvk), 128), v128)
    v_pad = _round_up(V, tvk_eff)
    vchunk_eff = min(int(vchunk), tvk_eff)

    ids_flat = ids.reshape(N, L).astype(jnp.int32)
    if n_pad != N:
        # Padded rows gather id 0 (padding row); they are sliced off below anyway.
        ids_flat = jnp.pad(ids_flat, ((0, n_pad - N), (0, 0)))

    w = weight.astype(jnp.bfloat16)            # bf16 table: native MXU rate, half HBM
    if v_pad != V or d_pad != D:
        w = jnp.pad(w, ((0, v_pad - V), (0, d_pad - D)))

    apply_dropout = bool(training) and (dropout is not None) and float(dropout) > 0.0
    p = float(dropout) if apply_dropout else 0.0
    if apply_dropout:
        assert 0.0 < p < 1.0, "dropout probability must be in (0, 1)"
    seed_arr = jnp.array([seed], dtype=jnp.int32)

    grid = (n_pad // tm_eff, v_pad // tvk_eff)

    kernel = functools.partial(
        _embed_sum_dropout_kernel,
        L=L, tm=tm_eff, tvk=tvk_eff, vchunk=vchunk_eff, d_pad=d_pad,
        p=p, apply_dropout=apply_dropout,
    )

    # Explicit VMEM budget: double-buffered ids / bf16 weight / out tiles, the f32
    # accumulator, and the per-chunk counts temporaries (int32 + bf16).
    vmem_need = (
        2 * tm_eff * 128 * 4                   # ids tile pads L -> 128 lanes
        + 2 * tvk_eff * d_pad * 2              # bf16 weight tiles
        + 2 * tm_eff * d_pad * 4               # out tiles
        + tm_eff * d_pad * 4                   # accumulator
        + 2 * tm_eff * vchunk_eff * 8          # counts temporaries
    )
    vmem_limit = int(min(max(vmem_need + (4 << 20), 16 << 20), 48 << 20))

    cost = pl.CostEstimate(
        flops=2 * n_pad * v_pad * d_pad,
        transcendentals=0,
        bytes_accessed=(
            n_pad * L * 4                                    # ids
            + (n_pad // tm_eff) * v_pad * d_pad * 2          # bf16 weight re-stream
            + n_pad * d_pad * 4                              # output
        ),
    )

    out = pl.pallas_call(
        kernel,
        out_shape=jax.ShapeDtypeStruct((n_pad, d_pad), jnp.float32),
        grid_spec=pltpu.PrefetchScalarGridSpec(
            num_scalar_prefetch=1,  # seed lands in SMEM
            grid=grid,
            in_specs=[
                pl.BlockSpec((tm_eff, L), lambda i, k, seed: (i, 0)),       # ids tile
                pl.BlockSpec((tvk_eff, d_pad), lambda i, k, seed: (k, 0)),  # weight slice
            ],
            out_specs=pl.BlockSpec((tm_eff, d_pad), lambda i, k, seed: (i, 0)),
            scratch_shapes=[pltpu.VMEM((tm_eff, d_pad), jnp.float32)],      # accumulator
        ),
        compiler_params=pltpu.CompilerParams(
            dimension_semantics=("parallel", "arbitrary"),
            vmem_limit_bytes=vmem_limit,
        ),
        cost_estimate=cost,
    )(seed_arr, ids_flat, w)

    return out[:N, :D].reshape(B, S, D)


if __name__ == "__main__":
    # Small, deterministic example consistent with the module's forward:
    # batch=2, seq=8, up to 3 labels per token, vocab=32, embedding_dim=32.
    B, S, L, V, D = 2, 8, 3, 32, 32

    key = jax.random.PRNGKey(0)
    k_ids, k_w = jax.random.split(key)

    # Multi-label id lists, padded with padding_idx=0.
    ids = jax.random.randint(k_ids, (B, S, L), 0, V, dtype=jnp.int32)

    # nn.Embedding weight, deterministically initialized; row 0 zeroed (padding_idx=0).
    weight = jax.random.normal(k_w, (V, D), dtype=jnp.float32)
    weight = weight.at[0].set(0.0)

    # Training mode (dropout active).
    out_train = jax.block_until_ready(
        multi_label_embedding(ids, weight, dropout=0.5, training=True, seed=0)
    )
    assert out_train.shape == (B, S, D), out_train.shape
    assert out_train.dtype == jnp.float32
    assert bool(jnp.all(jnp.isfinite(out_train)))

    # Eval mode (dropout off) against a pure-JAX gather-sum reference.
    # The kernel streams the table in bf16, so the reference uses the same cast;
    # counts <= L and f32 accumulation keep everything else exact.
    out_eval = jax.block_until_ready(
        multi_label_embedding(ids, weight, dropout=0.5, training=False)
    )
    w_bf16 = weight.astype(jnp.bfloat16).astype(jnp.float32)
    ref = w_bf16[ids].sum(axis=2)  # (B, S, D)
    assert jnp.allclose(out_eval, ref, atol=1e-5), "embedding-sum mismatch"

    # Dropout check: surviving entries equal eval / (1 - p); dropped entries are 0.
    kept = out_train != 0.0
    assert bool(
        jnp.allclose(
            jnp.where(kept, out_train, 0.0),
            jnp.where(kept, 2.0 * out_eval, 0.0),
            atol=1e-4,
        )
    ), "dropout scaling mismatch"

    print("KERNEL_OK")
</pallas_src>

<mosaic_0001>
module attributes {stable_mosaic.version = 11 : i64} {
  func.func @_embed_sum_dropout_kernel(%arg0: i32, %arg1: i32, %arg2: memref<1xi32, #tpu.memory_space<smem>>, %arg3: memref<8x3xi32, #tpu.memory_space<vmem>>, %arg4: memref<128x128xbf16, #tpu.memory_space<vmem>>, %arg5: memref<8x128xf32, #tpu.memory_space<vmem>>, %arg6: memref<8x128xf32, #tpu.memory_space<vmem>>) attributes {dimension_semantics = [#tpu.dimension_semantics<parallel>, #tpu.dimension_semantics<arbitrary>], iteration_bounds = array<i64: 2, 1>, scalar_prefetch = 1 : i64, scratch_operands = 1 : i64, tpu.core_type = #tpu.core_type<tc>, window_params = [{transform_indices = @transform_0, window_bounds = array<i64: 8, 3>}, {transform_indices = @transform_1, window_bounds = array<i64: 128, 128>}, {transform_indices = @transform_2, window_bounds = array<i64: 8, 128>}]} {
    %c0_i32 = arith.constant 0 : i32
    %0 = arith.cmpi eq, %arg1, %c0_i32 : i32
    %1 = arith.extui %0 : i1 to i32
    %c0_i32_0 = arith.constant 0 : i32
    %2 = arith.cmpi ne, %1, %c0_i32_0 : i32
    scf.if %2 {
      %cst_9 = arith.constant 0.000000e+00 : f32
      %24 = vector.broadcast %cst_9 : f32 to vector<8x128xf32>
      %c0_10 = arith.constant 0 : index
      %c0_11 = arith.constant 0 : index
      %25 = vector.load %arg6[%c0_10, %c0_11] : memref<8x128xf32, #tpu.memory_space<vmem>>, vector<8x128xf32>
      tpu.vector_store %arg6[%c0_10, %c0_11], %24 {strides = array<i32>} : memref<8x128xf32, #tpu.memory_space<vmem>>, vector<8x128xf32>,
    } else {
    }
    %c0 = arith.constant 0 : index
    %c0_1 = arith.constant 0 : index
    %3 = vector.load %arg3[%c0, %c0_1] : memref<8x3xi32, #tpu.memory_space<vmem>>, vector<8x3xi32>
    %c128_i32 = arith.constant 128 : i32
    %4 = arith.muli %arg1, %c128_i32 : i32
    %5 = vector.broadcast %4 : i32 to vector<8x3xi32>
    %6 = arith.cmpi sge, %3, %5 : vector<8x3xi32>
    %c128_i32_2 = arith.constant 128 : i32
    %7 = arith.addi %4, %c128_i32_2 : i32
    %8 = vector.broadcast %7 : i32 to vector<8x3xi32>
    %9 = arith.cmpi slt, %3, %8 : vector<8x3xi32>
    %10 = arith.andi %6, %9 : vector<8x3xi1>
    %cst = arith.constant 1.000000e+00 : f32
    %cst_3 = arith.constant 0.000000e+00 : f32
    %11 = vector.broadcast %cst : f32 to vector<8x3xf32>
    %12 = vector.broadcast %cst_3 : f32 to vector<8x3xf32>
    %13 = arith.select %10, %11, %12 : vector<8x3xi1>, vector<8x3xf32>
    %14 = vector.shape_cast %13 : vector<8x3xf32> to vector<1x8x3xf32>
    %cst_4 = arith.constant dense<0xFF800000> : vector<1xf32>
    %15 = vector.multi_reduction <maximumf>, %14, %cst_4 [1, 2] : vector<1x8x3xf32> to vector<1xf32>
    %16 = vector.shape_cast %15 : vector<1xf32> to vector<1x1x1xf32>
    %17 = vector.extract %16[0, 0, 0] : f32 from vector<1x1x1xf32>
    %cst_5 = arith.constant 0.000000e+00 : f32
    %18 = arith.cmpf ogt, %17, %cst_5 : f32
    %19 = arith.extui %18 : i1 to i32
    %c0_i32_6 = arith.constant 0 : i32
    %20 = arith.cmpi ne, %19, %c0_i32_6 : i32
    scf.if %20 {
      %24 = vector.broadcast %4 : i32 to vector<8x3xi32>
      %25 = arith.subi %3, %24 : vector<8x3xi32>
      %c0_9 = arith.constant 0 : index
      %c0_10 = arith.constant 0 : index
      %26 = vector.load %arg6[%c0_9, %c0_10] : memref<8x128xf32, #tpu.memory_space<vmem>>, vector<8x128xf32>
      %27 = tpu.iota {dimensions = array<i32: 1>} : vector<8x128xi32>
      %c0_i32_11 = arith.constant 0 : i32
      %28 = vector.broadcast %c0_i32_11 : i32 to vector<8x3xi32>
      %29 = arith.subi %25, %28 : vector<8x3xi32>
      %30 = vector.extract_strided_slice %29 {offsets = [0, 0], sizes = [8, 1], strides = [1, 1]} : vector<8x3xi32> to vector<8x1xi32>
      %31 = vector.broadcast %30 : vector<8x1xi32> to vector<8x128xi32>
      %32 = arith.cmpi eq, %31, %27 : vector<8x128xi32>
      %33 = arith.extui %32 : vector<8x128xi1> to vector<8x128xi32>
      %34 = vector.extract_strided_slice %29 {offsets = [0, 1], sizes = [8, 1], strides = [1, 1]} : vector<8x3xi32> to vector<8x1xi32>
      %35 = vector.broadcast %34 : vector<8x1xi32> to vector<8x128xi32>
      %36 = arith.cmpi eq, %35, %27 : vector<8x128xi32>
      %37 = arith.extui %36 : vector<8x128xi1> to vector<8x128xi32>
      %38 = arith.addi %33, %37 : vector<8x128xi32>
      %39 = vector.extract_strided_slice %29 {offsets = [0, 2], sizes = [8, 1], strides = [1, 1]} : vector<8x3xi32> to vector<8x1xi32>
      %40 = vector.broadcast %39 : vector<8x1xi32> to vector<8x128xi32>
      %41 = arith.cmpi eq, %40, %27 : vector<8x128xi32>
      %42 = arith.extui %41 : vector<8x128xi1> to vector<8x128xi32>
      %43 = arith.addi %38, %42 : vector<8x128xi32>
      %44 = arith.sitofp %43 : vector<8x128xi32> to vector<8x128xbf16>
      %c0_12 = arith.constant 0 : index
      %c0_13 = arith.constant 0 : index
      %45 = vector.load %arg4[%c0_12, %c0_13] : memref<128x128xbf16, #tpu.memory_space<vmem>>, vector<128x128xbf16>
      %cst_14 = arith.constant dense<0.000000e+00> : vector<8x128xf32>
      %46 = tpu.matmul %44, %45, %cst_14 {dimension_numbers = #tpu.dot_dimension_numbers<[1], [0], [0], [1], [0, 0, 1, 1], [], []>} : vector<8x128xbf16>, vector<128x128xbf16>, vector<8x128xf32> -> vector<8x128xf32>
      %47 = arith.addf %26, %46 : vector<8x128xf32>
      %c0_15 = arith.constant 0 : index
      %c0_16 = arith.constant 0 : index
      %48 = vector.load %arg6[%c0_15, %c0_16] : memref<8x128xf32, #tpu.memory_space<vmem>>, vector<8x128xf32>
      tpu.vector_store %arg6[%c0_15, %c0_16], %47 {strides = array<i32>} : memref<8x128xf32, #tpu.memory_space<vmem>>, vector<8x128xf32>,
    } else {
    }
    %c0_i32_7 = arith.constant 0 : i32
    %21 = arith.cmpi eq, %arg1, %c0_i32_7 : i32
    %22 = arith.extui %21 : i1 to i32
    %c0_i32_8 = arith.constant 0 : i32
    %23 = arith.cmpi ne, %22, %c0_i32_8 : i32
    scf.if %23 {
      %c0_9 = arith.constant 0 : index
      %c0_10 = arith.constant 0 : index
      %24 = vector.load %arg6[%c0_9, %c0_10] : memref<8x128xf32, #tpu.memory_space<vmem>>, vector<8x128xf32>
      %25 = tpu.iota {dimensions = array<i32: 0>} : vector<8x128xi32>
      %c8_i32 = arith.constant 8 : i32
      %26 = arith.muli %arg0, %c8_i32 : i32
      %27 = vector.broadcast %26 : i32 to vector<8x128xi32>
      %28 = arith.addi %25, %27 : vector<8x128xi32>
      %29 = tpu.iota {dimensions = array<i32: 1>} : vector<8x128xi32>
      %c128_i32_11 = arith.constant 128 : i32
      %30 = vector.broadcast %c128_i32_11 : i32 to vector<8x128xi32>
      %31 = arith.muli %28, %30 : vector<8x128xi32>
      %32 = arith.addi %31, %29 : vector<8x128xi32>
      %c0_12 = arith.constant 0 : index
      %33 = memref.load %arg2[%c0_12] : memref<1xi32, #tpu.memory_space<smem>>
      %34 = vector.broadcast %33 : i32 to vector<8x128xi32>
      %35 = arith.addi %32, %34 : vector<8x128xi32>
      %c16_i32 = arith.constant 16 : i32
      %36 = vector.broadcast %c16_i32 : i32 to vector<8x128xi32>
      %37 = arith.shrui %35, %36 : vector<8x128xi32>
      %38 = arith.xori %35, %37 : vector<8x128xi32>
      %c2146121005_i32 = arith.constant 2146121005 : i32
      %39 = vector.broadcast %c2146121005_i32 : i32 to vector<8x128xi32>
      %40 = arith.muli %38, %39 : vector<8x128xi32>
      %c15_i32 = arith.constant 15 : i32
      %41 = vector.broadcast %c15_i32 : i32 to vector<8x128xi32>
      %42 = arith.shrui %40, %41 : vector<8x128xi32>
      %43 = arith.xori %40, %42 : vector<8x128xi32>
      %c-2073254261_i32 = arith.constant -2073254261 : i32
      %44 = vector.broadcast %c-2073254261_i32 : i32 to vector<8x128xi32>
      %45 = arith.muli %43, %44 : vector<8x128xi32>
      %c16_i32_13 = arith.constant 16 : i32
      %46 = vector.broadcast %c16_i32_13 : i32 to vector<8x128xi32>
      %47 = arith.shrui %45, %46 : vector<8x128xi32>
      %48 = arith.xori %45, %47 : vector<8x128xi32>
      %c-2147483648_i32 = arith.constant -2147483648 : i32
      %49 = vector.broadcast %c-2147483648_i32 : i32 to vector<8x128xi32>
      %50 = arith.cmpi uge, %48, %49 : vector<8x128xi32>
      %cst_14 = arith.constant 2.000000e+00 : f32
      %51 = vector.broadcast %cst_14 : f32 to vector<8x128xf32>
      %52 = arith.mulf %24, %51 : vector<8x128xf32>
      %cst_15 = arith.constant 0.000000e+00 : f32
      %53 = vector.broadcast %cst_15 : f32 to vector<8x128xf32>
      %54 = arith.select %50, %52, %53 : vector<8x128xi1>, vector<8x128xf32>
      %c0_16 = arith.constant 0 : index
      %c0_17 = arith.constant 0 : index
      %55 = vector.load %arg5[%c0_16, %c0_17] : memref<8x128xf32, #tpu.memory_space<vmem>>, vector<8x128xf32>
      tpu.vector_store %arg5[%c0_16, %c0_17], %54 {strides = array<i32>} : memref<8x128xf32, #tpu.memory_space<vmem>>, vector<8x128xf32>,
    } else {
    }
    return
  }
  func.func @transform_0(%arg0: i32, %arg1: i32, %arg2: memref<1xi32, #tpu.memory_space<smem>>) -> (i32, i32) {
    %c0_i32 = arith.constant 0 : i32
    %c0_i32_0 = arith.constant 0 : i32
    return %arg0, %c0_i32 : i32, i32
  }
  func.func @transform_1(%arg0: i32, %arg1: i32, %arg2: memref<1xi32, #tpu.memory_space<smem>>) -> (i32, i32) {
    %c0_i32 = arith.constant 0 : i32
    %c0_i32_0 = arith.constant 0 : i32
    return %arg1, %c0_i32 : i32, i32
  }
  func.func @transform_2(%arg0: i32, %arg1: i32, %arg2: memref<1xi32, #tpu.memory_space<smem>>) -> (i32, i32) {
    %c0_i32 = arith.constant 0 : i32
    %c0_i32_0 = arith.constant 0 : i32
    return %arg0, %c0_i32 : i32, i32
  }
}

</mosaic_0001>

<llo_original>
// kernel: tpu_custom_call.1
$region0: #{tpu_custom_call.1}
  #allocation0 [shape = 'u32[]', space=smem, size = 0x4, offset = 0x4, fixed_abs, tag = 'smem constant byte address 0x4 - core index']
  #allocation1 [shape = 'u32[72,128]{1,0:T(1,128)}', space=vmem, size = 0x9000, scoped, tag = 'internal scratch']
  #allocation2 [shape = 'f32[8,128]{1,0:T(8,128)}', space=vmem, size = 0x1000, scoped, tag = 'scratch operand']
  #allocation3 [shape = 's32[1]{0}', space=sflag, size = 0x4, scoped, tag = 'scoped memory for tpu_custom_call.1']
  #allocation4 [shape = 's32[1]{0:T(128)S(6)}', space=smem, size = 0x200, scoped, tag = 'prefetched SMEM operand 0']
  %s0 = inlined_call_operand.<no memory space> [shape: s32[1], index: 0, kind: input, shape index: {}]
  %s1 = inlined_call_operand.vmem [shape: s32[16,3], index: 1, kind: input, shape index: {}]
  %s2 = inlined_call_operand.hbm [shape: bf16[128,128], index: 2, kind: input, shape index: {}]
  %s3 = inlined_call_operand.hbm [shape: f32[16,128], index: 3, kind: output, shape index: {}]
  %s4 = sld [smem:[#allocation0]]
  $region57: #{tpu_custom_call.1} parent=0
    _
  %s6 = ssub.s32 1, %s4
  %s7 = scalar_select 0, %s6, %s4
  %8 = sst [smem:[#allocation4]] %s0
  $region1: #{tpu_custom_call.1} parent=0
    #allocation5 [shape = 'u8[32768]{0}', space=vmem, size = 0x8000, scoped, tag = 'input window, operand 2, single buffered']
    #allocation6 [shape = 's32[2]{0}', space=sflag, size = 0x8, scoped, tag = 'scoped memory for tpu_custom_call.1']
    #allocation7 [shape = 's32[2]{0}', space=sflag, size = 0x8, scoped, tag = 'scoped memory for tpu_custom_call.1']
    #allocation8 [shape = 'u8[8192]{0}', space=vmem, size = 0x2000, scoped, tag = 'output window, operand 0']
    %9 = vsyncpa [#allocation6], 0
    %10 = vsyncpa [#allocation7], 0
    %s11 = scalar_lea.sflag [#allocation7], 1
    %12 = vsyncpa %s11, 0
    loop: start=0, step=1, limit=4
    $region2: #{tpu_custom_call.1} parent=1 // loop_pre_header
      _
    $region3: #{tpu_custom_call.1} parent=1 // loop_header
      %s14 = sphi 0, %s18
      %p15 = scmp.ge.s32.totalorder %s14, 4
      %s21 = sphi 0, %s33
      %s22 = sphi 0, %s29
      %s23 = sphi 0, %s21
      %s24 = sphi 0, %s22
      %s25 = sphi 0, %s23
      %s26 = sphi 0, %s24
      %s36 = sphi 0, %s38
      %s39 = sphi 0, %s36
      %s40 = sphi 0, %s39
      %s56 = sphi 0, %s40
      %s62 = sphi 0, %s64
      %s65 = sphi 0, %s62
      %s66 = sphi 0, %s65
      %s82 = sphi 0, %s66
      %s88 = sphi 0, %s90
      %s91 = sphi 0, %s88
      %s92 = sphi 0, %s91
      %s108 = sphi 0, %s92
    $region4: #{tpu_custom_call.1} parent=1 // loop_header_branch
      %17 = sbr.rel (%p15) target = $region8
    $region5: #{tpu_custom_call.1} parent=1 // loop_body
      %s19 = ssub.s32 %s14, 1
      %s20 = ssub.s32 %s14, 2
      %s27 = sadd.s32 1, %s22
      %p28 = scmp.ge.s32.totalorder %s27, 1
      %s29 = scalar_select %p28, 0, %s27
      %s30 = sadd.s32 1, %s21
      %s31 = scalar_select %p28, %s30, %s21
      %p32 = scmp.ge.s32.totalorder %s31, 2
      %s33 = scalar_select %p32, 0, %s31
      %s34 = ssub.s32 %s21, %s33
      %p35 = scmp.eq.s32.totalorder %s34, 0
      %s37 = sadd.s32 %s36, 1
      %s38 = scalar_select %p35, %s36, %s37
      %p41 = pneg %p35
      %p42 = scmp.eq.s32.totalorder %s14, 1
      %p43 = por %p41, %p42
      %p44 = scmp.ne.s32.totalorder %s36, %s39
      %p45 = scmp.eq.s32.totalorder %s14, 0
      %p46 = por %p44, %p45
      %p47 = scmp.ne.s32.totalorder %s36, %s39
      %p48 = scmp.eq.s32.totalorder %s19, 1
      %p49 = por %p47, %p48
      %p50 = scmp.ne.s32.totalorder %s39, %s40
      %p51 = scmp.eq.s32.totalorder %s19, 0
      %p52 = por %p50, %p51
      %p53 = scmp.ne.s32.totalorder %s39, %s40
      %p54 = scmp.eq.s32.totalorder %s20, 1
      %p55 = por %p53, %p54
      %p57 = scmp.ne.s32.totalorder %s40, %s56
      %p58 = scmp.eq.s32.totalorder %s20, 0
      %p59 = por %p57, %p58
      %s60 = ssub.s32 %s22, %s29
      %p61 = scmp.eq.s32.totalorder %s60, 0
      %s63 = sadd.s32 %s62, 1
      %s64 = scalar_select %p61, %s62, %s63
      %p67 = pneg %p61
      %p68 = scmp.eq.s32.totalorder %s14, 1
      %p69 = por %p67, %p68
      %p70 = scmp.ne.s32.totalorder %s62, %s65
      %p71 = scmp.eq.s32.totalorder %s14, 0
      %p72 = por %p70, %p71
      %p73 = scmp.ne.s32.totalorder %s62, %s65
      %p74 = scmp.eq.s32.totalorder %s19, 1
      %p75 = por %p73, %p74
      %p76 = scmp.ne.s32.totalorder %s65, %s66
      %p77 = scmp.eq.s32.totalorder %s19, 0
      %p78 = por %p76, %p77
      %p79 = scmp.ne.s32.totalorder %s65, %s66
      %p80 = scmp.eq.s32.totalorder %s20, 1
      %p81 = por %p79, %p80
      %p83 = scmp.ne.s32.totalorder %s66, %s82
      %p84 = scmp.eq.s32.totalorder %s20, 0
      %p85 = por %p83, %p84
      %s86 = ssub.s32 %s21, %s33
      %p87 = scmp.eq.s32.totalorder %s86, 0
      %s89 = sadd.s32 %s88, 1
      %s90 = scalar_select %p87, %s88, %s89
      %p93 = pneg %p87
      %p94 = scmp.eq.s32.totalorder %s14, 1
      %p95 = por %p93, %p94
      %p96 = scmp.ne.s32.totalorder %s88, %s91
      %p97 = scmp.eq.s32.totalorder %s14, 0
      %p98 = por %p96, %p97
      %p99 = scmp.ne.s32.totalorder %s88, %s91
      %p100 = scmp.eq.s32.totalorder %s19, 1
      %p101 = por %p99, %p100
      %p102 = scmp.ne.s32.totalorder %s91, %s92
      %p103 = scmp.eq.s32.totalorder %s19, 0
      %p104 = por %p102, %p103
      %p105 = scmp.ne.s32.totalorder %s91, %s92
      %p106 = scmp.eq.s32.totalorder %s20, 1
      %p107 = por %p105, %p106
      %p109 = scmp.ne.s32.totalorder %s92, %s108
      %p110 = scmp.eq.s32.totalorder %s20, 0
      %p111 = por %p109, %p110
      %p112 = scmp.le.s32.totalorder 1, %s14
      %p113 = scmp.lt.s32.totalorder %s14, 3
      %p114 = pnand %p112, %p113
      %p115 = pneg %p114
      // Predicated region
      $region9: #{tpu_custom_call.1} parent=5 // pred_check
        _
      $region10: #{tpu_custom_call.1} parent=5 // pred_check_branch
        %117 = sbr.rel (%p114) target = $region12
      $region11: #{tpu_custom_call.1} parent=5 // pred_region
        %s118 = ssub.s32 %s14, 1
        // Predicated region
        $region13: #{tpu_custom_call.1} parent=11 // pred_check
          %p119 = pneg %p78
        $region14: #{tpu_custom_call.1} parent=11 // pred_check_branch
          %121 = sbr.rel (%p119) target = $region16
        $region15: #{tpu_custom_call.1} parent=11 // pred_region
          %s122 = smul.u32 16, %s24
          %124 = vsyncadd [#allocation6], 0
          %s125 = smul.addr %s122, 4
          %s126 = scalar_lea.hbm %s2, %s125
          %s127 = sshll.u32 %s126, 4
          %s128 = int_to_ptr.hbm [resolvable:$true] %s127
          %s129 = sshll.u32 [#allocation5], 4
          %s130 = int_to_ptr.vmem [resolvable:$true] %s129
          %135 = dma.hbm_to_vmem [thread:$0]  %s128, 1024, %s130, [#allocation6], 64, 64, 4
        $region16: #{tpu_custom_call.1} parent=11 // pred_fallthru
          _
      $region12: #{tpu_custom_call.1} parent=5 // pred_fallthru
        _
      %p136 = scmp.lt.s32.totalorder %s14, 2
      // Predicated region
      $region17: #{tpu_custom_call.1} parent=5 // pred_check
        %p137 = pneg %p136
      $region18: #{tpu_custom_call.1} parent=5 // pred_check_branch
        %139 = sbr.rel (%p137) target = $region20
      $region19: #{tpu_custom_call.1} parent=5 // pred_region
        // Predicated region
        $region21: #{tpu_custom_call.1} parent=19 // pred_check
          %p140 = pneg %p46
        $region22: #{tpu_custom_call.1} parent=19 // pred_check_branch
          %142 = sbr.rel (%p140) target = $region24
        $region23: #{tpu_custom_call.1} parent=19 // pred_region
          %p143 = scmp.lt.s32.totalorder %s21, 1
          %s144 = scalar_select %p143, %s21, 1
          %s145 = smul.addr %s144, 8
          %s146 = scalar_lea.vmem %s1, %s145
        $region24: #{tpu_custom_call.1} parent=19 // pred_fallthru
          _
      $region20: #{tpu_custom_call.1} parent=5 // pred_fallthru
        _
      %p147 = scmp.le.s32.totalorder 1, %s14
      %p148 = scmp.lt.s32.totalorder %s14, 3
      %p149 = pnand %p147, %p148
      %p150 = pneg %p149
      // Predicated region
      $region25: #{tpu_custom_call.1} parent=5 // pred_check
        _
      $region26: #{tpu_custom_call.1} parent=5 // pred_check_branch
        %152 = sbr.rel (%p149) target = $region28
      $region27: #{tpu_custom_call.1} parent=5 // pred_region
        %s153 = ssub.s32 %s14, 1
        // Predicated region
        $region29: #{tpu_custom_call.1} parent=27 // pred_check
          %p154 = pneg %p78
        $region30: #{tpu_custom_call.1} parent=27 // pred_check_branch
          %156 = sbr.rel (%p154) target = $region32
        $region31: #{tpu_custom_call.1} parent=27 // pred_region
          %158 = dma.done [#allocation6], 1024
        $region32: #{tpu_custom_call.1} parent=27 // pred_fallthru
          _
        %p159 = scmp.lt.s32.totalorder %s23, 1
        %s160 = scalar_select %p159, %s23, 1
        %s161 = smul.addr %s160, 8
        %s162 = scalar_lea.vmem %s1, %s161
        %p163 = pneg %p52
        %p164 = pneg %p49
        %p165 = pneg %p78
        %p166 = pneg %p75
        %p167 = pneg %p104
        %p168 = pneg %p101
        %s169 = sand.u32 %s91, 1
        %s170 = scalar_lea.sflag [#allocation7], %s169
        %s171 = sand.u32 %s91, 1
        %s172 = smul.addr %s171, 8
        %s173 = scalar_lea.vmem [#allocation8], %s172
        %p174 = scmp.lt.s32.totalorder %s23, 1
        %s175 = scalar_select %p174, %s23, 1
        %s176 = smul.addr %s175, 8
        %s177 = scalar_lea.vmem %s1, %s176
        %s178 = smul.u32 16, %s24
        %p179 = scmp.eq.s32.totalorder %s24, 0
        // Predicated region
        $region33: #{tpu_custom_call.1} parent=27 // pred_check
          %p180 = pneg %p179
        $region34: #{tpu_custom_call.1} parent=27 // pred_check_branch
          %182 = sbr.rel (%p180) target = $region36
        $region35: #{tpu_custom_call.1} parent=27 // pred_region
          %183 = vst [vmem:[#allocation2] sm:$0xff] 0.0
        $region36: #{tpu_custom_call.1} parent=27 // pred_fallthru
          _
        %v184 = vld [vmem:[%s177] sm:$0xff]
        %s185 = smul.u32 %s24, 128
        %v186 = vstv %s185
        %vm187 = vcmp.ge.s32.totalorder %v184, %v186
        %s188 = sadd.s32 %s185, 128
        %v189 = vstv %s188
        %vm190 = vcmp.lt.s32.totalorder %v184, %v189
        %vm191 = vmand %vm187, %vm190
        %v192 = vsel %vm191, 1.0, 0.0
        %vm193 = vcmask 23552
        %v194 = vsel %vm193, %v192, -inf
        %195 = vmax.xlane.f32.xlu0 %v194
        %v196 = vpop.xlane.xlu0 %195
        %v197 = vrot.slane %v196, 4
        %v198 = vmax.f32 %v196, %v197
        %v199 = vrot.slane %v198, 2
        %v200 = vmax.f32 %v198, %v199
        %v201 = vrot.slane %v200, 1
        %v202 = vmax.f32 %v200, %v201
        %s203 = vtos %v202
        %p204 = scmp.gt.f32.partialorder %s203, 0.0
        // Predicated region
        $region37: #{tpu_custom_call.1} parent=27 // pred_check
          %p205 = pneg %p204
        $region38: #{tpu_custom_call.1} parent=27 // pred_check_branch
          %207 = sbr.rel (%p205) target = $region40
        $region39: #{tpu_custom_call.1} parent=27 // pred_region
          %v208 = vsub.s32 %v184, %v186
          %v209 = vld [vmem:[#allocation2] sm:$0xff]
          %v210 = vlaneseq
          %v211 = vand.u32 %v210, 127
          %212 = vset.pattern.permute.xlu0 0
          %213 = vperm.xlu0 %212, %v208
          %v214 = vpop.permute.xlu0 %213
          %vm215 = vcmp.eq.s32.totalorder %v214, %v211
          %v216 = vsel %vm215, 1, 0
          %217 = vset.pattern.permute.xlu0 1
          %218 = vperm.xlu0 %217, %v208
          %v219 = vpop.permute.xlu0 %218
          %vm220 = vcmp.eq.s32.totalorder %v219, %v211
          %v221 = vsel %vm220, 1, 0
          %v222 = vadd.s32 %v216, %v221
          %223 = vset.pattern.permute.xlu0 2
          %224 = vperm.xlu0 %223, %v208
          %v225 = vpop.permute.xlu0 %224
          %vm226 = vcmp.eq.s32.totalorder %v225, %v211
          %v227 = vsel %vm226, 1, 0
          %v228 = vadd.s32 %v222, %v227
          %v229 = vcvt.s32.f32 %v228
          %v230 = vpack.c.bf16 %v229, %v229
          %v231 = vld [vmem:[#allocation5] sm:$0xf]
          %v232 = vld [vmem:[#allocation5 + $0x4] sm:$0xf]
          %v233 = vld [vmem:[#allocation5 + $0x8] sm:$0xf]
          %v234 = vld [vmem:[#allocation5 + $0xc] sm:$0xf]
          %v235 = vld [vmem:[#allocation5 + $0x10] sm:$0xf]
          %v236 = vld [vmem:[#allocation5 + $0x14] sm:$0xf]
          %v237 = vld [vmem:[#allocation5 + $0x18] sm:$0xf]
          %v238 = vld [vmem:[#allocation5 + $0x1c] sm:$0xf]
          %v239 = vld [vmem:[#allocation5 + $0x20] sm:$0xf]
          %v240 = vld [vmem:[#allocation5 + $0x24] sm:$0xf]
          %v241 = vld [vmem:[#allocation5 + $0x28] sm:$0xf]
          %v242 = vld [vmem:[#allocation5 + $0x2c] sm:$0xf]
          %v243 = vld [vmem:[#allocation5 + $0x30] sm:$0xf]
          %v244 = vld [vmem:[#allocation5 + $0x34] sm:$0xf]
          %v245 = vld [vmem:[#allocation5 + $0x38] sm:$0xf]
          %v246 = vld [vmem:[#allocation5 + $0x3c] sm:$0xf]
          %v263 = vunpack.c.l.b16 %v231
          %v264 = vunpack.c.l.b16 %v232
          %v265 = vunpack.c.l.b16 %v233
          %v266 = vunpack.c.l.b16 %v234
          %v267 = vunpack.c.l.b16 %v235
          %v268 = vunpack.c.l.b16 %v236
          %v269 = vunpack.c.l.b16 %v237
          %v270 = vunpack.c.l.b16 %v238
          %v271 = vunpack.c.l.b16 %v239
          %v272 = vunpack.c.l.b16 %v240
          %v273 = vunpack.c.l.b16 %v241
          %v274 = vunpack.c.l.b16 %v242
          %v275 = vunpack.c.l.b16 %v243
          %v276 = vunpack.c.l.b16 %v244
          %v277 = vunpack.c.l.b16 %v245
          %v278 = vunpack.c.l.b16 %v246
          %v279 = vpack.c.b16 %v264, %v263
          %v280 = vpack.c.b16 %v266, %v265
          %v281 = vpack.c.b16 %v268, %v267
          %v282 = vpack.c.b16 %v270, %v269
          %v283 = vpack.c.b16 %v272, %v271
          %v284 = vpack.c.b16 %v274, %v273
          %v285 = vpack.c.b16 %v276, %v275
          %v286 = vpack.c.b16 %v278, %v277
          %295 = vmatpush.bf16.msra.mxu0 %v286
          %296 = vmatpush.bf16.msra.mxu0 %v285
          %297 = vmatpush.bf16.msra.mxu0 %v284
          %298 = vmatpush.bf16.msra.mxu0 %v283
          %299 = vmatpush.bf16.msra.mxu0 %v282
          %300 = vmatpush.bf16.msra.mxu0 %v281
          %301 = vmatpush.bf16.msra.mxu0 %v280
          %302 = vmatpush.bf16.msra.mxu0 %v279
          %303 = vmatmul.bf16.gmra.mxu0 %v230
          %v304 = vpop.f32.mrf.mxu0
          %v305 = vadd.f32 0.0, %v304
          %v306 = vpop.f32.mrf.mxu0
          %307 = vdwg.mxu0
          %v308 = vadd.f32 %v209, %v305
          %309 = vst [vmem:[#allocation2] sm:$0xff] %v308
        $region40: #{tpu_custom_call.1} parent=27 // pred_fallthru
          _
        // Predicated region
        $region41: #{tpu_custom_call.1} parent=27 // pred_check
          %p310 = pneg %p179
        $region42: #{tpu_custom_call.1} parent=27 // pred_check_branch
          %312 = sbr.rel (%p310) target = $region44
        $region43: #{tpu_custom_call.1} parent=27 // pred_region
          %v313 = vld [vmem:[#allocation2] sm:$0xff]
          %v314 = vlaneseq
          %v315 = vshrl.u32 %v314, 7
          %s316 = smul.u32 %s23, 8
          %v317 = vstv %s316
          %v318 = vadd.s32 %v315, %v317
          %v319 = vlaneseq
          %v320 = vand.u32 %v319, 127
          %v321 = vmul.u32 %v318, 128
          %v322 = vadd.s32 %v321, %v320
          %s323 = sld [smem:[#allocation4]]
          %v324 = vstv %s323
          %v325 = vadd.s32 %v322, %v324
          %v326 = vshrl.u32 %v325, 16
          %v327 = vxor.u32 %v325, %v326
          %v328 = vmul.u32 %v327, 2146121005
          %v329 = vshrl.u32 %v328, 15
          %v330 = vxor.u32 %v328, %v329
          %v331 = vmul.u32 %v330, 2221713035
          %v332 = vshrl.u32 %v331, 16
          %v333 = vxor.u32 %v331, %v332
          %v334 = vadd.s32 %v333, 2147483648
          %vm336 = vcmp.ge.s32.totalorder %v334, 0
          %v337 = vmul.f32 %v313, 2.0
          %v338 = vsel %vm336, %v337, 0.0
          %339 = vst [vmem:[%s173] sm:$0xff] %v338
        $region44: #{tpu_custom_call.1} parent=27 // pred_fallthru
          _
        %s340 = sand.u32 %s91, 1
        %s341 = scalar_lea.sflag [#allocation7], %s340
        %s342 = sand.u32 %s91, 1
        %s343 = smul.addr %s342, 8
        %s344 = scalar_lea.vmem [#allocation8], %s343
        // Predicated region
        $region45: #{tpu_custom_call.1} parent=27 // pred_check
          %p345 = pneg %p101
        $region46: #{tpu_custom_call.1} parent=27 // pred_check_branch
          %347 = sbr.rel (%p345) target = $region48
        $region47: #{tpu_custom_call.1} parent=27 // pred_region
          %349 = vsyncadd %s341, 0
          %s350 = smul.addr %s23, 8
          %s351 = scalar_lea.hbm %s3, %s350
          %s353 = sshll.u32 %s344, 4
          %s354 = int_to_ptr.vmem [resolvable:$true] %s353
          %s355 = sshll.u32 %s351, 4
          %s356 = int_to_ptr.hbm [resolvable:$true] %s355
          %358 = dma.vmem_to_hbm [thread:$0]  %s354, 128, %s356, %s341
        $region48: #{tpu_custom_call.1} parent=27 // pred_fallthru
          _
      $region28: #{tpu_custom_call.1} parent=5 // pred_fallthru
        _
      %p359 = scmp.le.s32.totalorder 2, %s14
      // Predicated region
      $region49: #{tpu_custom_call.1} parent=5 // pred_check
        %p360 = pneg %p359
      $region50: #{tpu_custom_call.1} parent=5 // pred_check_branch
        %362 = sbr.rel (%p360) target = $region52
      $region51: #{tpu_custom_call.1} parent=5 // pred_region
        %s363 = ssub.s32 %s14, 2
        // Predicated region
        $region53: #{tpu_custom_call.1} parent=51 // pred_check
          %p364 = pneg %p107
        $region54: #{tpu_custom_call.1} parent=51 // pred_check_branch
          %366 = sbr.rel (%p364) target = $region56
        $region55: #{tpu_custom_call.1} parent=51 // pred_region
          %s367 = sand.u32 %s92, 1
          %s368 = scalar_lea.sflag [#allocation7], %s367
          %s369 = sand.u32 %s92, 1
          %s370 = smul.addr %s369, 8
          %s371 = scalar_lea.vmem [#allocation8], %s370
          %373 = dma.done %s368, 128
        $region56: #{tpu_custom_call.1} parent=51 // pred_fallthru
          _
      $region52: #{tpu_custom_call.1} parent=5 // pred_fallthru
        _
    $region6: #{tpu_custom_call.1} parent=1 // loop_footer
      %s18 = sadd.s32 1, %s14
    $region7: #{tpu_custom_call.1} parent=1 // loop_footer_branch
      %13 = sbr.rel target = $region3
    $region8: #{tpu_custom_call.1} parent=1 // loop_exit
      _
    %374 = vsyncpa [#allocation6], 1
    %s375 = scalar_lea.sflag [#allocation6], 1
    %376 = vsyncpa %s375, 1
    %377 = vsyncpa [#allocation7], 1
    %s378 = scalar_lea.sflag [#allocation7], 1
    %379 = vsyncpa %s378, 1

</llo_original>
